<compile_context>
chip_gen: v7x
topology: tpu7x:2x2x1
jax: 0.10.0
libtpu: 0.0.40
codegen_flags: <defaults>
</compile_context>

<pallas_src>
import jax
import jax.numpy as jnp
from jax.experimental import pallas as pl
from jax.experimental.pallas import tpu as pltpu

BN_EPS = 1e-5


def predictor_kernel(x_ref, w1_ref, gamma_ref, beta_ref, w2_ref, b2_ref, out_ref):
    """One hidden-feature tile: h_j = relu(bn(x @ w1[:, j])) ; out += h_j @ w2[j, :].

    Grid axis 0 walks hidden tiles ("arbitrary" reduction axis); out_ref holds
    the full (N, Dout) f32 accumulator, resident in VMEM across the grid and
    written back to HBM once at the end.
    """
    j = pl.program_id(0)

    # ---- layer1 Linear (bias omitted: cancelled exactly by train-mode BN) ----
    x = x_ref[...].astype(jnp.bfloat16)                       # bf16 at the MXU
    h = jnp.dot(x, w1_ref[...], preferred_element_type=jnp.float32)  # (N, th) f32

    # ---- BatchNorm1d, training-mode batch stats, single pass over h ----
    inv_n = 1.0 / h.shape[0]
    mean = jnp.sum(h, axis=0, keepdims=True) * inv_n          # (1, th)
    ex2 = jnp.sum(h * h, axis=0, keepdims=True) * inv_n       # E[h^2]
    var = ex2 - mean * mean                                   # biased variance
    inv_std = jax.lax.rsqrt(var + BN_EPS)                     # EUP rsqrt
    scale = inv_std * gamma_ref[...]                          # fold affine: 2 ops/elem
    shift = beta_ref[...] - mean * scale
    h = jnp.maximum(h * scale + shift, 0.0)                   # BN + ReLU, f32 VPU

    # ---- layer2 partial product for this hidden tile ----
    part = jnp.dot(h.astype(jnp.bfloat16), w2_ref[...],
                   preferred_element_type=jnp.float32)        # (N, Dout) f32

    @pl.when(j == 0)
    def _init():
        out_ref[...] = part + b2_ref[...]

    @pl.when(j > 0)
    def _accum():
        out_ref[...] = out_ref[...] + part


def _pick_tile_h(hidden, requested):
    """Largest usable hidden tile: the requested size if it divides hidden,
    otherwise fall back to the full hidden extent (always legal)."""
    t = min(requested, hidden)
    if hidden % t == 0 and (t % 128 == 0 or t == hidden):
        return t
    return hidden


def predictor_forward(x, params, *, tile_h=128):
    """Fused predictor forward. b1 is accepted in `params` but not sent to the
    kernel (train-mode BN makes it a no-op)."""
    w1, b1, gamma, beta, w2, b2 = params
    del b1  # exactly cancelled by train-mode BatchNorm
    N, in_dim = x.shape
    hidden = w1.shape[1]
    out_dim = w2.shape[1]

    tile_h = _pick_tile_h(hidden, tile_h)
    grid = (hidden // tile_h,)

    # TODO(synk): at real SimSiam sizes (N~512-4096, in=out=2048) additionally tile
    # N / Dout with "parallel" axes (two-pass BN or per-N-tile stats) so v7x's 2nd
    # TensorCore is used and the 64 MiB VMEM budget is respected; and keep weights
    # VMEM-resident across calls (weight-stationary) instead of re-DMAing per call.
    return pl.pallas_call(
        predictor_kernel,
        out_shape=jax.ShapeDtypeStruct((N, out_dim), jnp.float32),
        grid_spec=pltpu.PrefetchScalarGridSpec(
            num_scalar_prefetch=0,
            grid=grid,
            in_specs=[
                pl.BlockSpec((N, in_dim), lambda j: (0, 0)),        # x: VMEM-resident
                pl.BlockSpec((in_dim, tile_h), lambda j: (0, j)),   # w1 column tile
                pl.BlockSpec((1, tile_h), lambda j: (0, j)),        # gamma tile
                pl.BlockSpec((1, tile_h), lambda j: (0, j)),        # beta tile
                pl.BlockSpec((tile_h, out_dim), lambda j: (j, 0)),  # w2 row tile
                pl.BlockSpec((1, out_dim), lambda j: (0, 0)),       # b2: resident
            ],
            out_specs=pl.BlockSpec((N, out_dim), lambda j: (0, 0)), # accumulator
        ),
        compiler_params=pltpu.CompilerParams(
            dimension_semantics=("arbitrary",),   # hidden axis is a reduction
            vmem_limit_bytes=64 << 20,
        ),
    )(x, w1, gamma, beta, w2, b2)


def init_params(key, in_dim, hidden_dim, out_dim):
    """PyTorch-default-style init. Linear weights stored pre-transposed (in, out)
    and in bfloat16 (bf16-native MXU; halves weight DMA). BN params f32."""
    k1, k2, k3, k4 = jax.random.split(key, 4)
    bound1 = 1.0 / jnp.sqrt(in_dim)
    bound2 = 1.0 / jnp.sqrt(hidden_dim)
    w1 = jax.random.uniform(k1, (in_dim, hidden_dim), jnp.float32,
                            -bound1, bound1).astype(jnp.bfloat16)
    b1 = jax.random.uniform(k2, (1, hidden_dim), jnp.float32, -bound1, bound1)
    gamma = jnp.ones((1, hidden_dim), jnp.float32)
    beta = jnp.zeros((1, hidden_dim), jnp.float32)
    w2 = jax.random.uniform(k3, (hidden_dim, out_dim), jnp.float32,
                            -bound2, bound2).astype(jnp.bfloat16)
    b2 = jax.random.uniform(k4, (1, out_dim), jnp.float32, -bound2, bound2)
    return (w1, b1, gamma, beta, w2, b2)


def predictor_ref(x, params):
    """Pure-JAX reference mirroring the module semantics (including b1, which the
    kernel drops because BN cancels it) with the same bf16-at-MXU precision."""
    w1, b1, gamma, beta, w2, b2 = params
    h = jnp.dot(x.astype(jnp.bfloat16), w1, preferred_element_type=jnp.float32) + b1
    mean = jnp.mean(h, axis=0, keepdims=True)
    var = jnp.mean((h - mean) ** 2, axis=0, keepdims=True)
    h = (h - mean) / jnp.sqrt(var + BN_EPS) * gamma + beta
    h = jnp.maximum(h, 0.0)
    return jnp.dot(h.astype(jnp.bfloat16), w2, preferred_element_type=jnp.float32) + b2


if __name__ == "__main__":
    # Scaled-down SimSiam predictor dims (real module: in=out=2048, hidden=512).
    N, IN_DIM, HIDDEN_DIM, OUT_DIM = 16, 512, 256, 512

    key = jax.random.PRNGKey(0)
    kx, kp = jax.random.split(key)
    x = jax.random.normal(kx, (N, IN_DIM), jnp.float32)
    params = init_params(kp, IN_DIM, HIDDEN_DIM, OUT_DIM)

    out = jax.block_until_ready(predictor_forward(x, params))
    ref = predictor_ref(x, params)

    assert out.shape == (N, OUT_DIM)
    assert jnp.allclose(out, ref, atol=2e-3, rtol=2e-3), (
        f"mismatch vs reference: max abs err = {float(jnp.max(jnp.abs(out - ref)))}")

    print("KERNEL_OK")
</pallas_src>

<mosaic_0001>
module attributes {stable_mosaic.version = 11 : i64} {
  func.func @predictor_kernel(%arg0: i32, %arg1: memref<16x512xf32, #tpu.memory_space<vmem>>, %arg2: memref<512x128xbf16, #tpu.memory_space<vmem>>, %arg3: memref<1x128xf32, #tpu.memory_space<vmem>>, %arg4: memref<1x128xf32, #tpu.memory_space<vmem>>, %arg5: memref<128x512xbf16, #tpu.memory_space<vmem>>, %arg6: memref<1x512xf32, #tpu.memory_space<vmem>>, %arg7: memref<16x512xf32, #tpu.memory_space<vmem>>) attributes {dimension_semantics = [#tpu.dimension_semantics<arbitrary>], iteration_bounds = array<i64: 2>, scalar_prefetch = 0 : i64, scratch_operands = 0 : i64, tpu.core_type = #tpu.core_type<tc>, window_params = [{pipeline_mode = #tpu.pipeline_mode<synchronous>, transform_indices = @transform_0, window_bounds = array<i64: 16, 512>}, {transform_indices = @transform_1, window_bounds = array<i64: 512, 128>}, {transform_indices = @transform_2, window_bounds = array<i64: 1, 128>}, {transform_indices = @transform_3, window_bounds = array<i64: 1, 128>}, {transform_indices = @transform_4, window_bounds = array<i64: 128, 512>}, {pipeline_mode = #tpu.pipeline_mode<synchronous>, transform_indices = @transform_5, window_bounds = array<i64: 1, 512>}, {pipeline_mode = #tpu.pipeline_mode<synchronous>, transform_indices = @transform_6, window_bounds = array<i64: 16, 512>}]} {
    %c0 = arith.constant 0 : index
    %c0_0 = arith.constant 0 : index
    %0 = vector.load %arg1[%c0, %c0_0] : memref<16x512xf32, #tpu.memory_space<vmem>>, vector<16x512xf32>
    %1 = arith.truncf %0 : vector<16x512xf32> to vector<16x512xbf16>
    %c0_1 = arith.constant 0 : index
    %c0_2 = arith.constant 0 : index
    %2 = vector.load %arg2[%c0_1, %c0_2] : memref<512x128xbf16, #tpu.memory_space<vmem>>, vector<512x128xbf16>
    %cst = arith.constant dense<0.000000e+00> : vector<16x128xf32>
    %3 = tpu.matmul %1, %2, %cst {dimension_numbers = #tpu.dot_dimension_numbers<[1], [0], [0], [1], [0, 0, 1, 1], [], []>} : vector<16x512xbf16>, vector<512x128xbf16>, vector<16x128xf32> -> vector<16x128xf32>
    %cst_3 = arith.constant dense<0.000000e+00> : vector<128xf32>
    %4 = vector.multi_reduction <add>, %3, %cst_3 [0] : vector<16x128xf32> to vector<128xf32>
    %5 = vector.shape_cast %4 : vector<128xf32> to vector<1x128xf32>
    %cst_4 = arith.constant 6.250000e-02 : f32
    %6 = vector.broadcast %cst_4 : f32 to vector<1x128xf32>
    %7 = arith.mulf %5, %6 : vector<1x128xf32>
    %8 = arith.mulf %3, %3 : vector<16x128xf32>
    %cst_5 = arith.constant dense<0.000000e+00> : vector<128xf32>
    %9 = vector.multi_reduction <add>, %8, %cst_5 [0] : vector<16x128xf32> to vector<128xf32>
    %10 = vector.shape_cast %9 : vector<128xf32> to vector<1x128xf32>
    %cst_6 = arith.constant 6.250000e-02 : f32
    %11 = vector.broadcast %cst_6 : f32 to vector<1x128xf32>
    %12 = arith.mulf %10, %11 : vector<1x128xf32>
    %13 = arith.mulf %7, %7 : vector<1x128xf32>
    %14 = arith.subf %12, %13 : vector<1x128xf32>
    %cst_7 = arith.constant 9.99999974E-6 : f32
    %15 = vector.broadcast %cst_7 : f32 to vector<1x128xf32>
    %16 = arith.addf %14, %15 : vector<1x128xf32>
    %17 = math.rsqrt %16 : vector<1x128xf32>
    %c0_8 = arith.constant 0 : index
    %c0_9 = arith.constant 0 : index
    %18 = vector.load %arg3[%c0_8, %c0_9] : memref<1x128xf32, #tpu.memory_space<vmem>>, vector<1x128xf32>
    %19 = arith.mulf %17, %18 : vector<1x128xf32>
    %c0_10 = arith.constant 0 : index
    %c0_11 = arith.constant 0 : index
    %20 = vector.load %arg4[%c0_10, %c0_11] : memref<1x128xf32, #tpu.memory_space<vmem>>, vector<1x128xf32>
    %21 = arith.mulf %7, %19 : vector<1x128xf32>
    %22 = arith.subf %20, %21 : vector<1x128xf32>
    %23 = vector.broadcast %19 : vector<1x128xf32> to vector<16x128xf32>
    %24 = arith.mulf %3, %23 : vector<16x128xf32>
    %25 = vector.broadcast %22 : vector<1x128xf32> to vector<16x128xf32>
    %26 = arith.addf %24, %25 : vector<16x128xf32>
    %cst_12 = arith.constant 0.000000e+00 : f32
    %27 = vector.broadcast %cst_12 : f32 to vector<16x128xf32>
    %28 = arith.maximumf %26, %27 : vector<16x128xf32>
    %29 = arith.truncf %28 : vector<16x128xf32> to vector<16x128xbf16>
    %c0_13 = arith.constant 0 : index
    %c0_14 = arith.constant 0 : index
    %30 = vector.load %arg5[%c0_13, %c0_14] : memref<128x512xbf16, #tpu.memory_space<vmem>>, vector<128x512xbf16>
    %cst_15 = arith.constant dense<0.000000e+00> : vector<16x512xf32>
    %31 = tpu.matmul %29, %30, %cst_15 {dimension_numbers = #tpu.dot_dimension_numbers<[1], [0], [0], [1], [0, 0, 1, 1], [], []>} : vector<16x128xbf16>, vector<128x512xbf16>, vector<16x512xf32> -> vector<16x512xf32>
    %c0_i32 = arith.constant 0 : i32
    %32 = arith.cmpi eq, %arg0, %c0_i32 : i32
    %33 = arith.extui %32 : i1 to i32
    %c0_i32_16 = arith.constant 0 : i32
    %34 = arith.cmpi ne, %33, %c0_i32_16 : i32
    scf.if %34 {
      %c0_19 = arith.constant 0 : index
      %c0_20 = arith.constant 0 : index
      %38 = vector.load %arg6[%c0_19, %c0_20] : memref<1x512xf32, #tpu.memory_space<vmem>>, vector<1x512xf32>
      %39 = vector.broadcast %38 : vector<1x512xf32> to vector<16x512xf32>
      %40 = arith.addf %31, %39 : vector<16x512xf32>
      %c0_21 = arith.constant 0 : index
      %c0_22 = arith.constant 0 : index
      %41 = vector.load %arg7[%c0_21, %c0_22] : memref<16x512xf32, #tpu.memory_space<vmem>>, vector<16x512xf32>
      tpu.vector_store %arg7[%c0_21, %c0_22], %40 {strides = array<i32>} : memref<16x512xf32, #tpu.memory_space<vmem>>, vector<16x512xf32>,
    } else {
    }
    %c0_i32_17 = arith.constant 0 : i32
    %35 = arith.cmpi sgt, %arg0, %c0_i32_17 : i32
    %36 = arith.extui %35 : i1 to i32
    %c0_i32_18 = arith.constant 0 : i32
    %37 = arith.cmpi ne, %36, %c0_i32_18 : i32
    scf.if %37 {
      %c0_19 = arith.constant 0 : index
      %c0_20 = arith.constant 0 : index
      %38 = vector.load %arg7[%c0_19, %c0_20] : memref<16x512xf32, #tpu.memory_space<vmem>>, vector<16x512xf32>
      %39 = arith.addf %38, %31 : vector<16x512xf32>
      %c0_21 = arith.constant 0 : index
      %c0_22 = arith.constant 0 : index
      %40 = vector.load %arg7[%c0_21, %c0_22] : memref<16x512xf32, #tpu.memory_space<vmem>>, vector<16x512xf32>
      tpu.vector_store %arg7[%c0_21, %c0_22], %39 {strides = array<i32>} : memref<16x512xf32, #tpu.memory_space<vmem>>, vector<16x512xf32>,
    } else {
    }
    return
  }
  func.func @transform_0(%arg0: i32) -> (i32, i32) {
    %c0_i32 = arith.constant 0 : i32
    %c0_i32_0 = arith.constant 0 : i32
    %c0_i32_1 = arith.constant 0 : i32
    return %c0_i32, %c0_i32_0 : i32, i32
  }
  func.func @transform_1(%arg0: i32) -> (i32, i32) {
    %c0_i32 = arith.constant 0 : i32
    %c0_i32_0 = arith.constant 0 : i32
    return %c0_i32, %arg0 : i32, i32
  }
  func.func @transform_2(%arg0: i32) -> (i32, i32) {
    %c0_i32 = arith.constant 0 : i32
    %c0_i32_0 = arith.constant 0 : i32
    return %c0_i32, %arg0 : i32, i32
  }
  func.func @transform_3(%arg0: i32) -> (i32, i32) {
    %c0_i32 = arith.constant 0 : i32
    %c0_i32_0 = arith.constant 0 : i32
    return %c0_i32, %arg0 : i32, i32
  }
  func.func @transform_4(%arg0: i32) -> (i32, i32) {
    %c0_i32 = arith.constant 0 : i32
    %c0_i32_0 = arith.constant 0 : i32
    return %arg0, %c0_i32 : i32, i32
  }
  func.func @transform_5(%arg0: i32) -> (i32, i32) {
    %c0_i32 = arith.constant 0 : i32
    %c0_i32_0 = arith.constant 0 : i32
    %c0_i32_1 = arith.constant 0 : i32
    return %c0_i32, %c0_i32_0 : i32, i32
  }
  func.func @transform_6(%arg0: i32) -> (i32, i32) {
    %c0_i32 = arith.constant 0 : i32
    %c0_i32_0 = arith.constant 0 : i32
    %c0_i32_1 = arith.constant 0 : i32
    return %c0_i32, %c0_i32_0 : i32, i32
  }
}

</mosaic_0001>

<llo_original>
// kernel: tpu_custom_call.1
$region0: #{tpu_custom_call.1}
  #allocation0 [shape = 'u32[]', space=smem, size = 0x4, offset = 0x4, fixed_abs, tag = 'smem constant byte address 0x4 - core index']
  #allocation1 [shape = 'u32[144,128]{1,0:T(1,128)}', space=vmem, size = 0x12000, scoped, tag = 'internal scratch']
  %s0 = inlined_call_operand.hbm [shape: f32[16,512], index: 0, kind: input, shape index: {}]
  %s1 = inlined_call_operand.hbm [shape: bf16[512,256], index: 1, kind: input, shape index: {}]
  %s2 = inlined_call_operand.hbm [shape: f32[1,256], index: 2, kind: input, shape index: {}]
  %s3 = inlined_call_operand.hbm [shape: f32[1,256], index: 3, kind: input, shape index: {}]
  %s4 = inlined_call_operand.hbm [shape: bf16[256,512], index: 4, kind: input, shape index: {}]
  %s5 = inlined_call_operand.hbm [shape: f32[1,512], index: 5, kind: input, shape index: {}]
  %s6 = inlined_call_operand.hbm [shape: f32[16,512], index: 6, kind: output, shape index: {}]
  %s7 = sld [smem:[#allocation0]]
  $region89: #{tpu_custom_call.1} parent=0
    _
  %s9 = ssub.s32 1, %s7
  %s10 = scalar_select 0, %s9, %s7
  $region1: #{tpu_custom_call.1} parent=0
    #allocation2 [shape = 'u8[32768]{0}', space=vmem, size = 0x8000, scoped, tag = 'input window, operand 0, single buffered']
    #allocation3 [shape = 's32[2]{0}', space=sflag, size = 0x8, scoped, tag = 'scoped memory for tpu_custom_call.1']
    #allocation4 [shape = 's32[2]{0}', space=sflag, size = 0x8, scoped, tag = 'scoped memory for tpu_custom_call.1']
    #allocation5 [shape = 'u8[262144]{0}', space=vmem, size = 0x40000, scoped, tag = 'input window, operand 1']
    #allocation6 [shape = 's32[2]{0}', space=sflag, size = 0x8, scoped, tag = 'scoped memory for tpu_custom_call.1']
    #allocation7 [shape = 'u8[1024]{0}', space=vmem, size = 0x400, scoped, tag = 'input window, operand 2']
    #allocation8 [shape = 'u8[1024]{0}', space=vmem, size = 0x400, scoped, tag = 'input window, operand 3']
    #allocation9 [shape = 's32[2]{0}', space=sflag, size = 0x8, scoped, tag = 'scoped memory for tpu_custom_call.1']
    #allocation10 [shape = 'u8[262144]{0}', space=vmem, size = 0x40000, scoped, tag = 'input window, operand 4']
    #allocation11 [shape = 'u8[2048]{0}', space=vmem, size = 0x800, scoped, tag = 'input window, operand 5, single buffered']
    #allocation12 [shape = 's32[1]{0}', space=sflag, size = 0x4, scoped, tag = 'scoped memory for tpu_custom_call.1']
    #allocation13 [shape = 'u8[32768]{0}', space=vmem, size = 0x8000, scoped, tag = 'output window, operand 0, single buffered']
    %11 = vsyncpa [#allocation3], 0
    %12 = vsyncpa [#allocation6], 0
    %s13 = scalar_lea.sflag [#allocation6], 1
    %14 = vsyncpa %s13, 0
    %15 = vsyncpa [#allocation9], 0
    %s16 = scalar_lea.sflag [#allocation9], 1
    %17 = vsyncpa %s16, 0
    %18 = vsyncpa [#allocation12], 0
    %19 = vsyncpa [#allocation4], 0
    loop: start=0, step=1, limit=4
    $region2: #{tpu_custom_call.1} parent=1 // loop_pre_header
      _
    $region3: #{tpu_custom_call.1} parent=1 // loop_header
      %s21 = sphi 0, %s25
      %p22 = scmp.ge.s32.totalorder %s21, 4
      %s29 = sphi 0, %s29
      %s31 = sphi 0, %s29
      %s32 = sphi 0, %s31
      %s46 = sphi 0, %s32
      %s52 = sphi 0, %s54
      %s55 = sphi 0, %s52
      %s56 = sphi 0, %s55
      %s72 = sphi 0, %s56
      %s78 = sphi 0, %s80
      %s81 = sphi 0, %s78
      %s82 = sphi 0, %s81
      %s98 = sphi 0, %s82
      %s104 = sphi 0, %s106
      %s107 = sphi 0, %s104
      %s108 = sphi 0, %s107
      %s124 = sphi 0, %s108
      %s130 = sphi 0, %s132
      %s133 = sphi 0, %s130
      %s134 = sphi 0, %s133
      %s150 = sphi 0, %s134
      %s154 = sphi 0, %s154
      %s156 = sphi 0, %s154
      %s157 = sphi 0, %s156
      %s171 = sphi 0, %s157
      %s175 = sphi 0, %s175
      %s177 = sphi 0, %s175
      %s178 = sphi 0, %s177
      %s192 = sphi 0, %s178
    $region4: #{tpu_custom_call.1} parent=1 // loop_header_branch
      %24 = sbr.rel (%p22) target = $region8
    $region5: #{tpu_custom_call.1} parent=1 // loop_body
      %s26 = ssub.s32 %s21, 1
      %s27 = ssub.s32 %s21, 2
      %s28 = sadd.s32 %s21, 1
      %s30 = sadd.s32 %s29, 1
      %p33 = scmp.eq.s32.totalorder %s21, 1
      %p34 = scmp.ne.s32.totalorder %s29, %s31
      %p35 = scmp.eq.s32.totalorder %s21, 0
      %p36 = por %p34, %p35
      %p37 = scmp.ne.s32.totalorder %s29, %s31
      %p38 = scmp.eq.s32.totalorder %s26, 1
      %p39 = por %p37, %p38
      %p40 = scmp.ne.s32.totalorder %s31, %s32
      %p41 = scmp.eq.s32.totalorder %s26, 0
      %p42 = por %p40, %p41
      %p43 = scmp.ne.s32.totalorder %s31, %s32
      %p44 = scmp.eq.s32.totalorder %s27, 1
      %p45 = por %p43, %p44
      %p47 = scmp.ne.s32.totalorder %s32, %s46
      %p48 = scmp.eq.s32.totalorder %s27, 0
      %p49 = por %p47, %p48
      %s50 = ssub.s32 %s21, %s28
      %p51 = scmp.eq.s32.totalorder %s50, 0
      %s53 = sadd.s32 %s52, 1
      %s54 = scalar_select %p51, %s52, %s53
      %p57 = pneg %p51
      %p58 = scmp.eq.s32.totalorder %s21, 1
      %p59 = por %p57, %p58
      %p60 = scmp.ne.s32.totalorder %s52, %s55
      %p61 = scmp.eq.s32.totalorder %s21, 0
      %p62 = por %p60, %p61
      %p63 = scmp.ne.s32.totalorder %s52, %s55
      %p64 = scmp.eq.s32.totalorder %s26, 1
      %p65 = por %p63, %p64
      %p66 = scmp.ne.s32.totalorder %s55, %s56
      %p67 = scmp.eq.s32.totalorder %s26, 0
      %p68 = por %p66, %p67
      %p69 = scmp.ne.s32.totalorder %s55, %s56
      %p70 = scmp.eq.s32.totalorder %s27, 1
      %p71 = por %p69, %p70
      %p73 = scmp.ne.s32.totalorder %s56, %s72
      %p74 = scmp.eq.s32.totalorder %s27, 0
      %p75 = por %p73, %p74
      %s76 = ssub.s32 %s21, %s28
      %p77 = scmp.eq.s32.totalorder %s76, 0
      %s79 = sadd.s32 %s78, 1
      %s80 = scalar_select %p77, %s78, %s79
      %p83 = pneg %p77
      %p84 = scmp.eq.s32.totalorder %s21, 1
      %p85 = por %p83, %p84
      %p86 = scmp.ne.s32.totalorder %s78, %s81
      %p87 = scmp.eq.s32.totalorder %s21, 0
      %p88 = por %p86, %p87
      %p89 = scmp.ne.s32.totalorder %s78, %s81
      %p90 = scmp.eq.s32.totalorder %s26, 1
      %p91 = por %p89, %p90
      %p92 = scmp.ne.s32.totalorder %s81, %s82
      %p93 = scmp.eq.s32.totalorder %s26, 0
      %p94 = por %p92, %p93
      %p95 = scmp.ne.s32.totalorder %s81, %s82
      %p96 = scmp.eq.s32.totalorder %s27, 1
      %p97 = por %p95, %p96
      %p99 = scmp.ne.s32.totalorder %s82, %s98
      %p100 = scmp.eq.s32.totalorder %s27, 0
      %p101 = por %p99, %p100
      %s102 = ssub.s32 %s21, %s28
      %p103 = scmp.eq.s32.totalorder %s102, 0
      %s105 = sadd.s32 %s104, 1
      %s106 = scalar_select %p103, %s104, %s105
      %p109 = pneg %p103
      %p110 = scmp.eq.s32.totalorder %s21, 1
      %p111 = por %p109, %p110
      %p112 = scmp.ne.s32.totalorder %s104, %s107
      %p113 = scmp.eq.s32.totalorder %s21, 0
      %p114 = por %p112, %p113
      %p115 = scmp.ne.s32.totalorder %s104, %s107
      %p116 = scmp.eq.s32.totalorder %s26, 1
      %p117 = por %p115, %p116
      %p118 = scmp.ne.s32.totalorder %s107, %s108
      %p119 = scmp.eq.s32.totalorder %s26, 0
      %p120 = por %p118, %p119
      %p121 = scmp.ne.s32.totalorder %s107, %s108
      %p122 = scmp.eq.s32.totalorder %s27, 1
      %p123 = por %p121, %p122
      %p125 = scmp.ne.s32.totalorder %s108, %s124
      %p126 = scmp.eq.s32.totalorder %s27, 0
      %p127 = por %p125, %p126
      %s128 = ssub.s32 %s21, %s28
      %p129 = scmp.eq.s32.totalorder %s128, 0
      %s131 = sadd.s32 %s130, 1
      %s132 = scalar_select %p129, %s130, %s131
      %p135 = pneg %p129
      %p136 = scmp.eq.s32.totalorder %s21, 1
      %p137 = por %p135, %p136
      %p138 = scmp.ne.s32.totalorder %s130, %s133
      %p139 = scmp.eq.s32.totalorder %s21, 0
      %p140 = por %p138, %p139
      %p141 = scmp.ne.s32.totalorder %s130, %s133
      %p142 = scmp.eq.s32.totalorder %s26, 1
      %p143 = por %p141, %p142
      %p144 = scmp.ne.s32.totalorder %s133, %s134
      %p145 = scmp.eq.s32.totalorder %s26, 0
      %p146 = por %p144, %p145
      %p147 = scmp.ne.s32.totalorder %s133, %s134
      %p148 = scmp.eq.s32.totalorder %s27, 1
      %p149 = por %p147, %p148
      %p151 = scmp.ne.s32.totalorder %s134, %s150
      %p152 = scmp.eq.s32.totalorder %s27, 0
      %p153 = por %p151, %p152
      %s155 = sadd.s32 %s154, 1
      %p158 = scmp.eq.s32.totalorder %s21, 1
      %p159 = scmp.ne.s32.totalorder %s154, %s156
      %p160 = scmp.eq.s32.totalorder %s21, 0
      %p161 = por %p159, %p160
      %p162 = scmp.ne.s32.totalorder %s154, %s156
      %p163 = scmp.eq.s32.totalorder %s26, 1
      %p164 = por %p162, %p163
      %p165 = scmp.ne.s32.totalorder %s156, %s157
      %p166 = scmp.eq.s32.totalorder %s26, 0
      %p167 = por %p165, %p166
      %p168 = scmp.ne.s32.totalorder %s156, %s157
      %p169 = scmp.eq.s32.totalorder %s27, 1
      %p170 = por %p168, %p169
      %p172 = scmp.ne.s32.totalorder %s157, %s171
      %p173 = scmp.eq.s32.totalorder %s27, 0
      %p174 = por %p172, %p173
      %s176 = sadd.s32 %s175, 1
      %p179 = scmp.eq.s32.totalorder %s21, 1
      %p180 = scmp.ne.s32.totalorder %s175, %s177
      %p181 = scmp.eq.s32.totalorder %s21, 0
      %p182 = por %p180, %p181
      %p183 = scmp.ne.s32.totalorder %s175, %s177
      %p184 = scmp.eq.s32.totalorder %s26, 1
      %p185 = por %p183, %p184
      %p186 = scmp.ne.s32.totalorder %s177, %s178
      %p187 = scmp.eq.s32.totalorder %s26, 0
      %p188 = por %p186, %p187
      %p189 = scmp.ne.s32.totalorder %s177, %s178
      %p190 = scmp.eq.s32.totalorder %s27, 1
      %p191 = por %p189, %p190
      %p193 = scmp.ne.s32.totalorder %s178, %s192
      %p194 = scmp.eq.s32.totalorder %s27, 0
      %p195 = por %p193, %p194
      %p196 = scmp.le.s32.totalorder 1, %s21
      %p197 = scmp.lt.s32.totalorder %s21, 3
      %p198 = pnand %p196, %p197
      %p199 = pneg %p198
      // Predicated region
      $region9: #{tpu_custom_call.1} parent=5 // pred_check
        _
      $region10: #{tpu_custom_call.1} parent=5 // pred_check_branch
        %201 = sbr.rel (%p198) target = $region12
      $region11: #{tpu_custom_call.1} parent=5 // pred_region
        %s202 = ssub.s32 %s21, 1
        // Predicated region
        $region13: #{tpu_custom_call.1} parent=11 // pred_check
          %p203 = pneg %p42
        $region14: #{tpu_custom_call.1} parent=11 // pred_check_branch
          %205 = sbr.rel (%p203) target = $region16
        $region15: #{tpu_custom_call.1} parent=11 // pred_region
          %s207 = ssub.s32 1024, 1024
          %208 = vsyncadd [#allocation3], %s207
          %s209 = sshll.u32 [#allocation2], 4
          %s210 = int_to_ptr.vmem [resolvable:$true] %s209
          %215 = dma.hbm_to_vmem [thread:$0]  %s0, 1024, %s210, [#allocation3], 512, 512, 32
        $region16: #{tpu_custom_call.1} parent=11 // pred_fallthru
          _
        // Predicated region
        $region17: #{tpu_custom_call.1} parent=11 // pred_check
          %p216 = pneg %p167
        $region18: #{tpu_custom_call.1} parent=11 // pred_check_branch
          %218 = sbr.rel (%p216) target = $region20
        $region19: #{tpu_custom_call.1} parent=11 // pred_region
          %s220 = ssub.s32 64, 64
          %221 = vsyncadd [#allocation12], %s220
          %s223 = sshll.u32 [#allocation11], 4
          %s224 = int_to_ptr.vmem [resolvable:$true] %s223
          %226 = dma.hbm_to_vmem [thread:$0]  %s5, 64, %s224, [#allocation12]
        $region20: #{tpu_custom_call.1} parent=11 // pred_fallthru
          _
      $region12: #{tpu_custom_call.1} parent=5 // pred_fallthru
        _
      %p227 = scmp.lt.s32.totalorder %s21, 2
      // Predicated region
      $region21: #{tpu_custom_call.1} parent=5 // pred_check
        %p228 = pneg %p227
      $region22: #{tpu_custom_call.1} parent=5 // pred_check_branch
        %230 = sbr.rel (%p228) target = $region24
      $region23: #{tpu_custom_call.1} parent=5 // pred_region
        // Predicated region
        $region25: #{tpu_custom_call.1} parent=23 // pred_check
          %p231 = pneg %p62
        $region26: #{tpu_custom_call.1} parent=23 // pred_check_branch
          %233 = sbr.rel (%p231) target = $region28
        $region27: #{tpu_custom_call.1} parent=23 // pred_region
          %s234 = sand.u32 %s21, 1
          %s235 = scalar_lea.sflag [#allocation6], %s234
          %s236 = sand.u32 %s52, 1
          %s237 = smul.addr %s236, 256
          %s238 = scalar_lea.vmem [#allocation5], %s237
          %s240 = ssub.s32 4096, 4096
          %241 = vsyncadd %s235, %s240
          %s242 = smul.addr %s21, 64
          %s243 = scalar_lea.hbm %s1, %s242
          %s244 = sshll.u32 %s238, 4
          %s245 = int_to_ptr.vmem [resolvable:$true] %s244
          %250 = dma.hbm_to_vmem [thread:$0]  %s243, 4096, %s245, %s235, 128, 64, 4
        $region28: #{tpu_custom_call.1} parent=23 // pred_fallthru
          _
        // Predicated region
        $region29: #{tpu_custom_call.1} parent=23 // pred_check
          %p251 = pneg %p88
        $region30: #{tpu_custom_call.1} parent=23 // pred_check_branch
          %253 = sbr.rel (%p251) target = $region32
        $region31: #{tpu_custom_call.1} parent=23 // pred_region
          %s254 = sand.u32 %s21, 1
          %s255 = scalar_lea.sflag [#allocation6], %s254
          %s256 = sand.u32 %s78, 1
          %s257 = scalar_lea.vmem [#allocation7], %s256
          %s259 = ssub.s32 16, 16
          %260 = vsyncadd %s255, %s259
          %s261 = smul.addr %s21, 16
          %s262 = scalar_lea.hbm %s2, %s261
          %s264 = sshll.u32 %s257, 4
          %s265 = int_to_ptr.vmem [resolvable:$true] %s264
          %267 = dma.hbm_to_vmem [thread:$0]  %s262, 16, %s265, %s255
        $region32: #{tpu_custom_call.1} parent=23 // pred_fallthru
          _
        // Predicated region
        $region33: #{tpu_custom_call.1} parent=23 // pred_check
          %p268 = pneg %p114
        $region34: #{tpu_custom_call.1} parent=23 // pred_check_branch
          %270 = sbr.rel (%p268) target = $region36
        $region35: #{tpu_custom_call.1} parent=23 // pred_region
          %s271 = sand.u32 %s21, 1
          %s272 = scalar_lea.sflag [#allocation9], %s271
          %s273 = sand.u32 %s104, 1
          %s274 = scalar_lea.vmem [#allocation8], %s273
          %s276 = ssub.s32 16, 16
          %277 = vsyncadd %s272, %s276
          %s278 = smul.addr %s21, 16
          %s279 = scalar_lea.hbm %s3, %s278
          %s281 = sshll.u32 %s274, 4
          %s282 = int_to_ptr.vmem [resolvable:$true] %s281
          %284 = dma.hbm_to_vmem [thread:$0]  %s279, 16, %s282, %s272
        $region36: #{tpu_custom_call.1} parent=23 // pred_fallthru
          _
        // Predicated region
        $region37: #{tpu_custom_call.1} parent=23 // pred_check
          %p285 = pneg %p140
        $region38: #{tpu_custom_call.1} parent=23 // pred_check_branch
          %287 = sbr.rel (%p285) target = $region40
        $region39: #{tpu_custom_call.1} parent=23 // pred_region
          %s288 = sand.u32 %s21, 1
          %s289 = scalar_lea.sflag [#allocation9], %s288
          %s290 = sand.u32 %s130, 1
          %s291 = smul.addr %s290, 256
          %s292 = scalar_lea.vmem [#allocation10], %s291
          %s293 = smul.u32 16, %s21
          %s295 = ssub.s32 4096, 4096
          %296 = vsyncadd %s289, %s295
          %s297 = smul.addr %s293, 4
          %s298 = smul.addr %s297, 64
          %s299 = scalar_lea.hbm %s4, %s298
          %s300 = sshll.u32 %s292, 4
          %s301 = int_to_ptr.vmem [resolvable:$true] %s300
          %306 = dma.hbm_to_vmem [thread:$0]  %s299, 4096, %s301, %s289, 256, 256, 16
        $region40: #{tpu_custom_call.1} parent=23 // pred_fallthru
          _
      $region24: #{tpu_custom_call.1} parent=5 // pred_fallthru
        _
      %p307 = scmp.le.s32.totalorder 1, %s21
      %p308 = scmp.lt.s32.totalorder %s21, 3
      %p309 = pnand %p307, %p308
      %p310 = pneg %p309
      // Predicated region
      $region41: #{tpu_custom_call.1} parent=5 // pred_check
        _
      $region42: #{tpu_custom_call.1} parent=5 // pred_check_branch
        %312 = sbr.rel (%p309) target = $region44
      $region43: #{tpu_custom_call.1} parent=5 // pred_region
        %s313 = ssub.s32 %s21, 1
        // Predicated region
        $region45: #{tpu_custom_call.1} parent=43 // pred_check
          %p314 = pneg %p42
        $region46: #{tpu_custom_call.1} parent=43 // pred_check_branch
          %316 = sbr.rel (%p314) target = $region48
        $region47: #{tpu_custom_call.1} parent=43 // pred_region
          %317 = dma.done [#allocation3], 1024
        $region48: #{tpu_custom_call.1} parent=43 // pred_fallthru
          _
        %s318 = sand.u32 %s26, 1
        %s319 = scalar_lea.sflag [#allocation6], %s318
        %s320 = sand.u32 %s55, 1
        %s321 = smul.addr %s320, 256
        %s322 = scalar_lea.vmem [#allocation5], %s321
        // Predicated region
        $region49: #{tpu_custom_call.1} parent=43 // pred_check
          %p323 = pneg %p68
        $region50: #{tpu_custom_call.1} parent=43 // pred_check_branch
          %325 = sbr.rel (%p323) target = $region52
        $region51: #{tpu_custom_call.1} parent=43 // pred_region
          %326 = dma.done %s319, 4096
        $region52: #{tpu_custom_call.1} parent=43 // pred_fallthru
          _
        %s327 = sand.u32 %s26, 1
        %s328 = scalar_lea.sflag [#allocation6], %s327
        %s329 = sand.u32 %s81, 1
        %s330 = scalar_lea.vmem [#allocation7], %s329
        // Predicated region
        $region53: #{tpu_custom_call.1} parent=43 // pred_check
          %p331 = pneg %p94
        $region54: #{tpu_custom_call.1} parent=43 // pred_check_branch
          %333 = sbr.rel (%p331) target = $region56
        $region55: #{tpu_custom_call.1} parent=43 // pred_region
          %334 = dma.done %s328, 16
        $region56: #{tpu_custom_call.1} parent=43 // pred_fallthru
          _
        %s335 = sand.u32 %s26, 1
        %s336 = scalar_lea.sflag [#allocation9], %s335
        %s337 = sand.u32 %s107, 1
        %s338 = scalar_lea.vmem [#allocation8], %s337
        // Predicated region
        $region57: #{tpu_custom_call.1} parent=43 // pred_check
          %p339 = pneg %p120
        $region58: #{tpu_custom_call.1} parent=43 // pred_check_branch
          %341 = sbr.rel (%p339) target = $region60
        $region59: #{tpu_custom_call.1} parent=43 // pred_region
          %342 = dma.done %s336, 16
        $region60: #{tpu_custom_call.1} parent=43 // pred_fallthru
          _
        %s343 = sand.u32 %s26, 1
        %s344 = scalar_lea.sflag [#allocation9], %s343
        %s345 = sand.u32 %s133, 1
        %s346 = smul.addr %s345, 256
        %s347 = scalar_lea.vmem [#allocation10], %s346
        // Predicated region
        $region61: #{tpu_custom_call.1} parent=43 // pred_check
          %p348 = pneg %p146
        $region62: #{tpu_custom_call.1} parent=43 // pred_check_branch
          %350 = sbr.rel (%p348) target = $region64
        $region63: #{tpu_custom_call.1} parent=43 // pred_region
          %351 = dma.done %s344, 4096
        $region64: #{tpu_custom_call.1} parent=43 // pred_fallthru
          _
        // Predicated region
        $region65: #{tpu_custom_call.1} parent=43 // pred_check
          %p352 = pneg %p167
        $region66: #{tpu_custom_call.1} parent=43 // pred_check_branch
          %354 = sbr.rel (%p352) target = $region68
        $region67: #{tpu_custom_call.1} parent=43 // pred_region
          %355 = dma.done [#allocation12], 64
        $region68: #{tpu_custom_call.1} parent=43 // pred_fallthru
          _
        %p356 = pneg %p42
        %p357 = pneg %p39
        %s358 = sand.u32 %s26, 1
        %s359 = scalar_lea.sflag [#allocation6], %s358
        %s360 = sand.u32 %s55, 1
        %s361 = smul.addr %s360, 256
        %s362 = scalar_lea.vmem [#allocation5], %s361
        %p363 = pneg %p68
        %p364 = pneg %p65
        %s365 = sand.u32 %s26, 1
        %s366 = scalar_lea.sflag [#allocation6], %s365
        %s367 = sand.u32 %s81, 1
        %s368 = scalar_lea.vmem [#allocation7], %s367
        %p369 = pneg %p94
        %p370 = pneg %p91
        %s371 = sand.u32 %s26, 1
        %s372 = scalar_lea.sflag [#allocation9], %s371
        %s373 = sand.u32 %s107, 1
        %s374 = scalar_lea.vmem [#allocation8], %s373
        %p375 = pneg %p120
        %p376 = pneg %p117
        %s377 = sand.u32 %s26, 1
        %s378 = scalar_lea.sflag [#allocation9], %s377
        %s379 = sand.u32 %s133, 1
        %s380 = smul.addr %s379, 256
        %s381 = scalar_lea.vmem [#allocation10], %s380
        %p382 = pneg %p146
        %p383 = pneg %p143
        %p384 = pneg %p167
        %p385 = pneg %p164
        %p386 = pneg %p188
        %p387 = pneg %p185
        %s388 = smul.u32 16, %s26
        %v390 = vld [vmem:[#allocation2] sm:$0xff]
        %v391 = vld [vmem:[#allocation2 + $0x8] sm:$0xff]
        %v392 = vld [vmem:[#allocation2 + $0x10] sm:$0xff]
        %v393 = vld [vmem:[#allocation2 + $0x18] sm:$0xff]
        %v394 = vld [vmem:[#allocation2 + $0x20] sm:$0xff]
        %v395 = vld [vmem:[#allocation2 + $0x28] sm:$0xff]
        %v396 = vld [vmem:[#allocation2 + $0x30] sm:$0xff]
        %v397 = vld [vmem:[#allocation2 + $0x38] sm:$0xff]
        %v398 = vpack.c.bf16 %v394, %v390
        %v399 = vpack.c.bf16 %v395, %v391
        %v400 = vpack.c.bf16 %v396, %v392
        %v401 = vpack.c.bf16 %v397, %v393
        %v402 = vld [vmem:[%s322] sm:$0xf]
        %v403 = vld [vmem:[%s322 + $0x4] sm:$0xf]
        %v404 = vld [vmem:[%s322 + $0x8] sm:$0xf]
        %v405 = vld [vmem:[%s322 + $0xc] sm:$0xf]
        %v406 = vld [vmem:[%s322 + $0x10] sm:$0xf]
        %v407 = vld [vmem:[%s322 + $0x14] sm:$0xf]
        %v408 = vld [vmem:[%s322 + $0x18] sm:$0xf]
        %v409 = vld [vmem:[%s322 + $0x1c] sm:$0xf]
        %v410 = vld [vmem:[%s322 + $0x20] sm:$0xf]
        %v411 = vld [vmem:[%s322 + $0x24] sm:$0xf]
        %v412 = vld [vmem:[%s322 + $0x28] sm:$0xf]
        %v413 = vld [vmem:[%s322 + $0x2c] sm:$0xf]
        %v414 = vld [vmem:[%s322 + $0x30] sm:$0xf]
        %v415 = vld [vmem:[%s322 + $0x34] sm:$0xf]
        %v416 = vld [vmem:[%s322 + $0x38] sm:$0xf]
        %v417 = vld [vmem:[%s322 + $0x3c] sm:$0xf]
        %v418 = vld [vmem:[%s322 + $0x40] sm:$0xf]
        %v419 = vld [vmem:[%s322 + $0x44] sm:$0xf]
        %v420 = vld [vmem:[%s322 + $0x48] sm:$0xf]
        %v421 = vld [vmem:[%s322 + $0x4c] sm:$0xf]
        %v422 = vld [vmem:[%s322 + $0x50] sm:$0xf]
        %v423 = vld [vmem:[%s322 + $0x54] sm:$0xf]
        %v424 = vld [vmem:[%s322 + $0x58] sm:$0xf]
        %v425 = vld [vmem:[%s322 + $0x5c] sm:$0xf]
        %v426 = vld [vmem:[%s322 + $0x60] sm:$0xf]
        %v427 = vld [vmem:[%s322 + $0x64] sm:$0xf]
        %v428 = vld [vmem:[%s322 + $0x68] sm:$0xf]
        %v429 = vld [vmem:[%s322 + $0x6c] sm:$0xf]
        %v430 = vld [vmem:[%s322 + $0x70] sm:$0xf]
        %v431 = vld [vmem:[%s322 + $0x74] sm:$0xf]
        %v432 = vld [vmem:[%s322 + $0x78] sm:$0xf]
        %v433 = vld [vmem:[%s322 + $0x7c] sm:$0xf]
        %v434 = vld [vmem:[%s322 + $0x80] sm:$0xf]
        %v435 = vld [vmem:[%s322 + $0x84] sm:$0xf]
        %v436 = vld [vmem:[%s322 + $0x88] sm:$0xf]
        %v437 = vld [vmem:[%s322 + $0x8c] sm:$0xf]
        %v438 = vld [vmem:[%s322 + $0x90] sm:$0xf]
        %v439 = vld [vmem:[%s322 + $0x94] sm:$0xf]
        %v440 = vld [vmem:[%s322 + $0x98] sm:$0xf]
        %v441 = vld [vmem:[%s322 + $0x9c] sm:$0xf]
        %v442 = vld [vmem:[%s322 + $0xa0] sm:$0xf]
        %v443 = vld [vmem:[%s322 + $0xa4] sm:$0xf]
        %v444 = vld [vmem:[%s322 + $0xa8] sm:$0xf]
        %v445 = vld [vmem:[%s322 + $0xac] sm:$0xf]
        %v446 = vld [vmem:[%s322 + $0xb0] sm:$0xf]
        %v447 = vld [vmem:[%s322 + $0xb4] sm:$0xf]
        %v448 = vld [vmem:[%s322 + $0xb8] sm:$0xf]
        %v449 = vld [vmem:[%s322 + $0xbc] sm:$0xf]
        %v450 = vld [vmem:[%s322 + $0xc0] sm:$0xf]
        %v451 = vld [vmem:[%s322 + $0xc4] sm:$0xf]
        %v452 = vld [vmem:[%s322 + $0xc8] sm:$0xf]
        %v453 = vld [vmem:[%s322 + $0xcc] sm:$0xf]
        %v454 = vld [vmem:[%s322 + $0xd0] sm:$0xf]
        %v455 = vld [vmem:[%s322 + $0xd4] sm:$0xf]
        %v456 = vld [vmem:[%s322 + $0xd8] sm:$0xf]
        %v457 = vld [vmem:[%s322 + $0xdc] sm:$0xf]
        %v458 = vld [vmem:[%s322 + $0xe0] sm:$0xf]
        %v459 = vld [vmem:[%s322 + $0xe4] sm:$0xf]
        %v460 = vld [vmem:[%s322 + $0xe8] sm:$0xf]
        %v461 = vld [vmem:[%s322 + $0xec] sm:$0xf]
        %v462 = vld [vmem:[%s322 + $0xf0] sm:$0xf]
        %v463 = vld [vmem:[%s322 + $0xf4] sm:$0xf]
        %v464 = vld [vmem:[%s322 + $0xf8] sm:$0xf]
        %v465 = vld [vmem:[%s322 + $0xfc] sm:$0xf]
        %v530 = vunpack.c.l.b16 %v402
        %v531 = vunpack.c.l.b16 %v403
        %v532 = vunpack.c.l.b16 %v404
        %v533 = vunpack.c.l.b16 %v405
        %v534 = vunpack.c.l.b16 %v406
        %v535 = vunpack.c.l.b16 %v407
        %v536 = vunpack.c.l.b16 %v408
        %v537 = vunpack.c.l.b16 %v409
        %v538 = vunpack.c.l.b16 %v410
        %v539 = vunpack.c.l.b16 %v411
        %v540 = vunpack.c.l.b16 %v412
        %v541 = vunpack.c.l.b16 %v413
        %v542 = vunpack.c.l.b16 %v414
        %v543 = vunpack.c.l.b16 %v415
        %v544 = vunpack.c.l.b16 %v416
        %v545 = vunpack.c.l.b16 %v417
        %v546 = vunpack.c.l.b16 %v418
        %v547 = vunpack.c.l.b16 %v419
        %v548 = vunpack.c.l.b16 %v420
        %v549 = vunpack.c.l.b16 %v421
        %v550 = vunpack.c.l.b16 %v422
        %v551 = vunpack.c.l.b16 %v423
        %v552 = vunpack.c.l.b16 %v424
        %v553 = vunpack.c.l.b16 %v425
        %v554 = vunpack.c.l.b16 %v426
        %v555 = vunpack.c.l.b16 %v427
        %v556 = vunpack.c.l.b16 %v428
        %v557 = vunpack.c.l.b16 %v429
        %v558 = vunpack.c.l.b16 %v430
        %v559 = vunpack.c.l.b16 %v431
        %v560 = vunpack.c.l.b16 %v432
        %v561 = vunpack.c.l.b16 %v433
        %v562 = vunpack.c.l.b16 %v434
        %v563 = vunpack.c.l.b16 %v435
        %v564 = vunpack.c.l.b16 %v436
        %v565 = vunpack.c.l.b16 %v437
        %v566 = vunpack.c.l.b16 %v438
        %v567 = vunpack.c.l.b16 %v439
        %v568 = vunpack.c.l.b16 %v440
        %v569 = vunpack.c.l.b16 %v441
        %v570 = vunpack.c.l.b16 %v442
        %v571 = vunpack.c.l.b16 %v443
        %v572 = vunpack.c.l.b16 %v444
        %v573 = vunpack.c.l.b16 %v445
        %v574 = vunpack.c.l.b16 %v446
        %v575 = vunpack.c.l.b16 %v447
        %v576 = vunpack.c.l.b16 %v448
        %v577 = vunpack.c.l.b16 %v449
        %v578 = vunpack.c.l.b16 %v450
        %v579 = vunpack.c.l.b16 %v451
        %v580 = vunpack.c.l.b16 %v452
        %v581 = vunpack.c.l.b16 %v453
        %v582 = vunpack.c.l.b16 %v454
        %v583 = vunpack.c.l.b16 %v455
        %v584 = vunpack.c.l.b16 %v456
        %v585 = vunpack.c.l.b16 %v457
        %v586 = vunpack.c.l.b16 %v458
        %v587 = vunpack.c.l.b16 %v459
        %v588 = vunpack.c.l.b16 %v460
        %v589 = vunpack.c.l.b16 %v461
        %v590 = vunpack.c.l.b16 %v462
        %v591 = vunpack.c.l.b16 %v463
        %v592 = vunpack.c.l.b16 %v464
        %v593 = vunpack.c.l.b16 %v465
        %v594 = vpack.c.b16 %v531, %v530
        %v595 = vpack.c.b16 %v533, %v532
        %v596 = vpack.c.b16 %v535, %v534
        %v597 = vpack.c.b16 %v537, %v536
        %v598 = vpack.c.b16 %v539, %v538
        %v599 = vpack.c.b16 %v541, %v540
        %v600 = vpack.c.b16 %v543, %v542
        %v601 = vpack.c.b16 %v545, %v544
        %v602 = vpack.c.b16 %v547, %v546
        %v603 = vpack.c.b16 %v549, %v548
        %v604 = vpack.c.b16 %v551, %v550
        %v605 = vpack.c.b16 %v553, %v552
        %v606 = vpack.c.b16 %v555, %v554
        %v607 = vpack.c.b16 %v557, %v556
        %v608 = vpack.c.b16 %v559, %v558
        %v609 = vpack.c.b16 %v561, %v560
        %v610 = vpack.c.b16 %v563, %v562
        %v611 = vpack.c.b16 %v565, %v564
        %v612 = vpack.c.b16 %v567, %v566
        %v613 = vpack.c.b16 %v569, %v568
        %v614 = vpack.c.b16 %v571, %v570
        %v615 = vpack.c.b16 %v573, %v572
        %v616 = vpack.c.b16 %v575, %v574
        %v617 = vpack.c.b16 %v577, %v576
        %v618 = vpack.c.b16 %v579, %v578
        %v619 = vpack.c.b16 %v581, %v580
        %v620 = vpack.c.b16 %v583, %v582
        %v621 = vpack.c.b16 %v585, %v584
        %v622 = vpack.c.b16 %v587, %v586
        %v623 = vpack.c.b16 %v589, %v588
        %v624 = vpack.c.b16 %v591, %v590
        %v625 = vpack.c.b16 %v593, %v592
        %658 = vmatprep.subr.bf16.mxu0 0
        %659 = vmatpush1.bf16.msra.mxu0 %v594
        %660 = vmatprep.subr.bf16.mxu0 0
        %661 = vmatpush1.bf16.msra.mxu0 %v595
        %662 = vmatprep.subr.bf16.mxu0 0
        %663 = vmatpush1.bf16.msra.mxu0 %v596
        %664 = vmatprep.subr.bf16.mxu0 0
        %665 = vmatpush1.bf16.msra.mxu0 %v597
        %666 = vmatprep.subr.bf16.mxu0 0
        %667 = vmatpush1.bf16.msra.mxu0 %v598
        %668 = vmatprep.subr.bf16.mxu0 0
        %669 = vmatpush1.bf16.msra.mxu0 %v599
        %670 = vmatprep.subr.bf16.mxu0 0
        %671 = vmatpush1.bf16.msra.mxu0 %v600
        %672 = vmatprep.subr.bf16.mxu0 0
        %673 = vmatpush1.bf16.msra.mxu0 %v601
        %674 = vmatprep.subr.bf16.mxu0 0
        %675 = vmatpush1.bf16.msra.mxu0 %v602
        %676 = vmatprep.subr.bf16.mxu0 0
        %677 = vmatpush1.bf16.msra.mxu0 %v603
        %678 = vmatprep.subr.bf16.mxu0 0
        %679 = vmatpush1.bf16.msra.mxu0 %v604
        %680 = vmatprep.subr.bf16.mxu0 0
        %681 = vmatpush1.bf16.msra.mxu0 %v605
        %682 = vmatprep.subr.bf16.mxu0 0
        %683 = vmatpush1.bf16.msra.mxu0 %v606
        %684 = vmatprep.subr.bf16.mxu0 0
        %685 = vmatpush1.bf16.msra.mxu0 %v607
        %686 = vmatprep.subr.bf16.mxu0 0
        %687 = vmatpush1.bf16.msra.mxu0 %v608
        %688 = vmatprep.subr.bf16.mxu0 0
        %689 = vmatpush1.bf16.msra.mxu0 %v609
        %690 = vmatprep.mubr.bf16.mxu0 %v399
        %691 = vmatmul.mubr.bf16.gmra.mrb[0].mxu0 %v398
        %v692 = vpop.f32.mrb[0].mxu0
        %v693 = vadd.f32 0.0, %v692
        %v694 = vpop.f32.mrb[0].mxu0
        %v695 = vpop.f32.mrb[0].mxu0
        %v696 = vadd.f32 0.0, %v695
        %v697 = vpop.f32.mrb[0].mxu0
        %698 = vdwg.mxu0
        %699 = vmatprep.subr.bf16.mxu0 0
        %700 = vmatpush1.bf16.msra.mxu0 %v610
        %701 = vmatprep.subr.bf16.mxu0 0
        %702 = vmatpush1.bf16.msra.mxu0 %v611
        %703 = vmatprep.subr.bf16.mxu0 0
        %704 = vmatpush1.bf16.msra.mxu0 %v612
        %705 = vmatprep.subr.bf16.mxu0 0
        %706 = vmatpush1.bf16.msra.mxu0 %v613
        %707 = vmatprep.subr.bf16.mxu0 0
        %708 = vmatpush1.bf16.msra.mxu0 %v614
        %709 = vmatprep.subr.bf16.mxu0 0
        %710 = vmatpush1.bf16.msra.mxu0 %v615
        %711 = vmatprep.subr.bf16.mxu0 0
        %712 = vmatpush1.bf16.msra.mxu0 %v616
        %713 = vmatprep.subr.bf16.mxu0 0
        %714 = vmatpush1.bf16.msra.mxu0 %v617
        %715 = vmatprep.subr.bf16.mxu0 0
        %716 = vmatpush1.bf16.msra.mxu0 %v618
        %717 = vmatprep.subr.bf16.mxu0 0
        %718 = vmatpush1.bf16.msra.mxu0 %v619
        %719 = vmatprep.subr.bf16.mxu0 0
        %720 = vmatpush1.bf16.msra.mxu0 %v620
        %721 = vmatprep.subr.bf16.mxu0 0
        %722 = vmatpush1.bf16.msra.mxu0 %v621
        %723 = vmatprep.subr.bf16.mxu0 0
        %724 = vmatpush1.bf16.msra.mxu0 %v622
        %725 = vmatprep.subr.bf16.mxu0 0
        %726 = vmatpush1.bf16.msra.mxu0 %v623
        %727 = vmatprep.subr.bf16.mxu0 0
        %728 = vmatpush1.bf16.msra.mxu0 %v624
        %729 = vmatprep.subr.bf16.mxu0 0
        %730 = vmatpush1.bf16.msra.mxu0 %v625
        %731 = vmatprep.mubr.bf16.mxu0 %v401
        %732 = vmatmul.mubr.bf16.gmra.mrb[0].mxu0 %v400
        %v733 = vpop.f32.mrb[0].mxu0
        %v734 = vadd.f32 %v693, %v733
        %v735 = vpop.f32.mrb[0].mxu0
        %v736 = vpop.f32.mrb[0].mxu0
        %v737 = vadd.f32 %v696, %v736
        %v738 = vpop.f32.mrb[0].mxu0
        %739 = vdwg.mxu0
        %v740 = vadd.f32 %v734, %v737
        %v741 = vrot.slane %v740, 4
        %v742 = vadd.f32 %v740, %v741
        %v743 = vrot.slane %v742, 2
        %v744 = vadd.f32 %v742, %v743
        %v745 = vrot.slane %v744, 1
        %v746 = vadd.f32 %v744, %v745
        %v747 = vmul.f32 %v746, 0.0625
        %v748 = vmul.f32 %v734, %v734
        %v749 = vmul.f32 %v737, %v737
        %v750 = vadd.f32 %v748, %v749
        %v751 = vrot.slane %v750, 4
        %v752 = vadd.f32 %v750, %v751
        %v753 = vrot.slane %v752, 2
        %v754 = vadd.f32 %v752, %v753
        %v755 = vrot.slane %v754, 1
        %v756 = vadd.f32 %v754, %v755
        %v757 = vmul.f32 %v756, 0.0625
        %v758 = vmul.f32 %v747, %v747
        %v759 = vsub.f32 %v757, %v758
        %v760 = vadd.f32 %v759, 1e-05
        %v761 = vrsqrt.pop %v760
        %v762 = vld [vmem:[%s330] sm:$0x1]
        %v763 = vmul.f32 %v761, %v762
        %v764 = vld [vmem:[%s338] sm:$0x1]
        %v765 = vmul.f32 %v747, %v763
        %v766 = vsub.f32 %v764, %v765
        %v767 = vlaneseq
        %v768 = vshrl.u32 %v767, 7
        %v769 = vsub.s32 0, %v768
        %v770 = vrot.slane %v763, %v769
        %v771 = vmul.f32 %v734, %v770
        %v772 = vmul.f32 %v737, %v770
        %v774 = vlaneseq
        %v775 = vshrl.u32 %v774, 7
        %v776 = vsub.s32 0, %v775
        %v777 = vrot.slane %v766, %v776
        %v779 = vadd.f32 %v771, %v777
        %v780 = vadd.f32 %v772, %v777
        %v781 = vmax.f32 %v779, 0.0
        %v782 = vmax.f32 %v780, 0.0
        %v783 = vpack.c.bf16 %v782, %v781
        %v784 = vld [vmem:[%s347] sm:$0xff]
        %v785 = vld [vmem:[%s347 + $0x8] sm:$0xff]
        %v786 = vld [vmem:[%s347 + $0x10] sm:$0xff]
        %v787 = vld [vmem:[%s347 + $0x18] sm:$0xff]
        %v788 = vld [vmem:[%s347 + $0x20] sm:$0xff]
        %v789 = vld [vmem:[%s347 + $0x28] sm:$0xff]
        %v790 = vld [vmem:[%s347 + $0x30] sm:$0xff]
        %v791 = vld [vmem:[%s347 + $0x38] sm:$0xff]
        %v792 = vld [vmem:[%s347 + $0x40] sm:$0xff]
        %v793 = vld [vmem:[%s347 + $0x48] sm:$0xff]
        %v794 = vld [vmem:[%s347 + $0x50] sm:$0xff]
        %v795 = vld [vmem:[%s347 + $0x58] sm:$0xff]
        %v796 = vld [vmem:[%s347 + $0x60] sm:$0xff]
        %v797 = vld [vmem:[%s347 + $0x68] sm:$0xff]
        %v798 = vld [vmem:[%s347 + $0x70] sm:$0xff]
        %v799 = vld [vmem:[%s347 + $0x78] sm:$0xff]
        %v800 = vld [vmem:[%s347 + $0x80] sm:$0xff]
        %v801 = vld [vmem:[%s347 + $0x88] sm:$0xff]
        %v802 = vld [vmem:[%s347 + $0x90] sm:$0xff]
        %v803 = vld [vmem:[%s347 + $0x98] sm:$0xff]
        %v804 = vld [vmem:[%s347 + $0xa0] sm:$0xff]
        %v805 = vld [vmem:[%s347 + $0xa8] sm:$0xff]
        %v806 = vld [vmem:[%s347 + $0xb0] sm:$0xff]
        %v807 = vld [vmem:[%s347 + $0xb8] sm:$0xff]
        %v808 = vld [vmem:[%s347 + $0xc0] sm:$0xff]
        %v809 = vld [vmem:[%s347 + $0xc8] sm:$0xff]
        %v810 = vld [vmem:[%s347 + $0xd0] sm:$0xff]
        %v811 = vld [vmem:[%s347 + $0xd8] sm:$0xff]
        %v812 = vld [vmem:[%s347 + $0xe0] sm:$0xff]
        %v813 = vld [vmem:[%s347 + $0xe8] sm:$0xff]
        %v814 = vld [vmem:[%s347 + $0xf0] sm:$0xff]
        %v815 = vld [vmem:[%s347 + $0xf8] sm:$0xff]
        %v848 = vunpack.c.l.b16 %v784
        %v849 = vunpack.c.h.b16 %v784
        %v850 = vunpack.c.l.b16 %v785
        %v851 = vunpack.c.h.b16 %v785
        %v852 = vunpack.c.l.b16 %v786
        %v853 = vunpack.c.h.b16 %v786
        %v854 = vunpack.c.l.b16 %v787
        %v855 = vunpack.c.h.b16 %v787
        %v856 = vunpack.c.l.b16 %v788
        %v857 = vunpack.c.h.b16 %v788
        %v858 = vunpack.c.l.b16 %v789
        %v859 = vunpack.c.h.b16 %v789
        %v860 = vunpack.c.l.b16 %v790
        %v861 = vunpack.c.h.b16 %v790
        %v862 = vunpack.c.l.b16 %v791
        %v863 = vunpack.c.h.b16 %v791
        %v864 = vunpack.c.l.b16 %v792
        %v865 = vunpack.c.h.b16 %v792
        %v866 = vunpack.c.l.b16 %v793
        %v867 = vunpack.c.h.b16 %v793
        %v868 = vunpack.c.l.b16 %v794
        %v869 = vunpack.c.h.b16 %v794
        %v870 = vunpack.c.l.b16 %v795
        %v871 = vunpack.c.h.b16 %v795
        %v872 = vunpack.c.l.b16 %v796
        %v873 = vunpack.c.h.b16 %v796
        %v874 = vunpack.c.l.b16 %v797
        %v875 = vunpack.c.h.b16 %v797
        %v876 = vunpack.c.l.b16 %v798
        %v877 = vunpack.c.h.b16 %v798
        %v878 = vunpack.c.l.b16 %v799
        %v879 = vunpack.c.h.b16 %v799
        %v880 = vunpack.c.l.b16 %v800
        %v881 = vunpack.c.h.b16 %v800
        %v882 = vunpack.c.l.b16 %v801
        %v883 = vunpack.c.h.b16 %v801
        %v884 = vunpack.c.l.b16 %v802
        %v885 = vunpack.c.h.b16 %v802
        %v886 = vunpack.c.l.b16 %v803
        %v887 = vunpack.c.h.b16 %v803
        %v888 = vunpack.c.l.b16 %v804
        %v889 = vunpack.c.h.b16 %v804
        %v890 = vunpack.c.l.b16 %v805
        %v891 = vunpack.c.h.b16 %v805
        %v892 = vunpack.c.l.b16 %v806
        %v893 = vunpack.c.h.b16 %v806
        %v894 = vunpack.c.l.b16 %v807
        %v895 = vunpack.c.h.b16 %v807
        %v896 = vunpack.c.l.b16 %v808
        %v897 = vunpack.c.h.b16 %v808
        %v898 = vunpack.c.l.b16 %v809
        %v899 = vunpack.c.h.b16 %v809
        %v900 = vunpack.c.l.b16 %v810
        %v901 = vunpack.c.h.b16 %v810
        %v902 = vunpack.c.l.b16 %v811
        %v903 = vunpack.c.h.b16 %v811
        %v904 = vunpack.c.l.b16 %v812
        %v905 = vunpack.c.h.b16 %v812
        %v906 = vunpack.c.l.b16 %v813
        %v907 = vunpack.c.h.b16 %v813
        %v908 = vunpack.c.l.b16 %v814
        %v909 = vunpack.c.h.b16 %v814
        %v910 = vunpack.c.l.b16 %v815
        %v911 = vunpack.c.h.b16 %v815
        %v912 = vpack.c.b16 %v852, %v848
        %v913 = vpack.c.b16 %v853, %v849
        %v914 = vpack.c.b16 %v854, %v850
        %v915 = vpack.c.b16 %v855, %v851
        %v916 = vpack.c.b16 %v860, %v856
        %v917 = vpack.c.b16 %v861, %v857
        %v918 = vpack.c.b16 %v862, %v858
        %v919 = vpack.c.b16 %v863, %v859
        %v920 = vpack.c.b16 %v868, %v864
        %v921 = vpack.c.b16 %v869, %v865
        %v922 = vpack.c.b16 %v870, %v866
        %v923 = vpack.c.b16 %v871, %v867
        %v924 = vpack.c.b16 %v876, %v872
        %v925 = vpack.c.b16 %v877, %v873
        %v926 = vpack.c.b16 %v878, %v874
        %v927 = vpack.c.b16 %v879, %v875
        %v928 = vpack.c.b16 %v884, %v880
        %v929 = vpack.c.b16 %v885, %v881
        %v930 = vpack.c.b16 %v886, %v882
        %v931 = vpack.c.b16 %v887, %v883
        %v932 = vpack.c.b16 %v892, %v888
        %v933 = vpack.c.b16 %v893, %v889
        %v934 = vpack.c.b16 %v894, %v890
        %v935 = vpack.c.b16 %v895, %v891
        %v936 = vpack.c.b16 %v900, %v896
        %v937 = vpack.c.b16 %v901, %v897
        %v938 = vpack.c.b16 %v902, %v898
        %v939 = vpack.c.b16 %v903, %v899
        %v940 = vpack.c.b16 %v908, %v904
        %v941 = vpack.c.b16 %v909, %v905
        %v942 = vpack.c.b16 %v910, %v906
        %v943 = vpack.c.b16 %v911, %v907
        %976 = vmatprep.subr.bf16.mxu0 %v913
        %977 = vmatpush1.bf16.msra.mxu0 %v912
        %978 = vmatprep.subr.bf16.mxu0 %v917
        %979 = vmatpush1.bf16.msra.mxu0 %v916
        %980 = vmatprep.subr.bf16.mxu0 %v921
        %981 = vmatpush1.bf16.msra.mxu0 %v920
        %982 = vmatprep.subr.bf16.mxu0 %v925
        %983 = vmatpush1.bf16.msra.mxu0 %v924
        %984 = vmatprep.subr.bf16.mxu0 %v929
        %985 = vmatpush1.bf16.msra.mxu0 %v928
        %986 = vmatprep.subr.bf16.mxu0 %v933
        %987 = vmatpush1.bf16.msra.mxu0 %v932
        %988 = vmatprep.subr.bf16.mxu0 %v937
        %989 = vmatpush1.bf16.msra.mxu0 %v936
        %990 = vmatprep.subr.bf16.mxu0 %v941
        %991 = vmatpush1.bf16.msra.mxu0 %v940
        %992 = vmatprep.subr.bf16.mxu0 0
        %993 = vmatpush1.bf16.msra.mxu0 0
        %994 = vmatprep.subr.bf16.mxu0 0
        %995 = vmatpush1.bf16.msra.mxu0 0
        %996 = vmatprep.subr.bf16.mxu0 0
        %997 = vmatpush1.bf16.msra.mxu0 0
        %998 = vmatprep.subr.bf16.mxu0 0
        %999 = vmatpush1.bf16.msra.mxu0 0
        %1000 = vmatprep.subr.bf16.mxu0 0
        %1001 = vmatpush1.bf16.msra.mxu0 0
        %1002 = vmatprep.subr.bf16.mxu0 0
        %1003 = vmatpush1.bf16.msra.mxu0 0
        %1004 = vmatprep.subr.bf16.mxu0 0
        %1005 = vmatpush1.bf16.msra.mxu0 0
        %1006 = vmatprep.subr.bf16.mxu0 0
        %1007 = vmatpush1.bf16.msra.mxu0 0
        %1008 = vmatprep.mubr.bf16.mxu0 0
        %1009 = vmatmul.mubr.bf16.gmra.mrb[0].mxu0 %v783
        %v1010 = vpop.f32.mrb[0].mxu0
        %v1011 = vadd.f32 0.0, %v1010
        %v1012 = vpop.f32.mrb[0].mxu0
        %v1013 = vadd.f32 0.0, %v1012
        %v1014 = vpop.f32.mrb[0].mxu0
        %v1015 = vadd.f32 0.0, %v1014
        %v1016 = vpop.f32.mrb[0].mxu0
        %v1017 = vadd.f32 0.0, %v1016
        %1018 = vdwg.mxu0
        %1019 = vmatprep.subr.bf16.mxu0 %v915
        %1020 = vmatpush1.bf16.msra.mxu0 %v914
        %1021 = vmatprep.subr.bf16.mxu0 %v919
        %1022 = vmatpush1.bf16.msra.mxu0 %v918
        %1023 = vmatprep.subr.bf16.mxu0 %v923
        %1024 = vmatpush1.bf16.msra.mxu0 %v922
        %1025 = vmatprep.subr.bf16.mxu0 %v927
        %1026 = vmatpush1.bf16.msra.mxu0 %v926
        %1027 = vmatprep.subr.bf16.mxu0 %v931
        %1028 = vmatpush1.bf16.msra.mxu0 %v930
        %1029 = vmatprep.subr.bf16.mxu0 %v935
        %1030 = vmatpush1.bf16.msra.mxu0 %v934
        %1031 = vmatprep.subr.bf16.mxu0 %v939
        %1032 = vmatpush1.bf16.msra.mxu0 %v938
        %1033 = vmatprep.subr.bf16.mxu0 %v943
        %1034 = vmatpush1.bf16.msra.mxu0 %v942
        %1035 = vmatprep.subr.bf16.mxu0 0
        %1036 = vmatpush1.bf16.msra.mxu0 0
        %1037 = vmatprep.subr.bf16.mxu0 0
        %1038 = vmatpush1.bf16.msra.mxu0 0
        %1039 = vmatprep.subr.bf16.mxu0 0
        %1040 = vmatpush1.bf16.msra.mxu0 0
        %1041 = vmatprep.subr.bf16.mxu0 0
        %1042 = vmatpush1.bf16.msra.mxu0 0
        %1043 = vmatprep.subr.bf16.mxu0 0
        %1044 = vmatpush1.bf16.msra.mxu0 0
        %1045 = vmatprep.subr.bf16.mxu0 0
        %1046 = vmatpush1.bf16.msra.mxu0 0
        %1047 = vmatprep.subr.bf16.mxu0 0
        %1048 = vmatpush1.bf16.msra.mxu0 0
        %1049 = vmatprep.subr.bf16.mxu0 0
        %1050 = vmatpush1.bf16.msra.mxu0 0
        %1051 = vmatprep.mubr.bf16.mxu0 0
        %1052 = vmatmul.mubr.bf16.gmra.mrb[0].mxu0 %v783
        %v1053 = vpop.f32.mrb[0].mxu0
        %v1054 = vadd.f32 0.0, %v1053
        %v1055 = vpop.f32.mrb[0].mxu0
        %v1056 = vadd.f32 0.0, %v1055
        %v1057 = vpop.f32.mrb[0].mxu0
        %v1058 = vadd.f32 0.0, %v1057
        %v1059 = vpop.f32.mrb[0].mxu0
        %v1060 = vadd.f32 0.0, %v1059
        %1061 = vdwg.mxu0
        %p1062 = scmp.eq.s32.totalorder %s26, 0
        // Predicated region
        $region69: #{tpu_custom_call.1} parent=43 // pred_check
          %p1063 = pneg %p1062
        $region70: #{tpu_custom_call.1} parent=43 // pred_check_branch
          %1065 = sbr.rel (%p1063) target = $region72
        $region71: #{tpu_custom_call.1} parent=43 // pred_region
          %v1066 = vld [vmem:[#allocation11] sm:$0xf]
          %v1068 = vlaneseq
          %v1069 = vshrl.u32 %v1068, 7
          %v1070 = vsub.s32 0, %v1069
          %v1071 = vrot.slane %v1066, %v1070
          %v1072 = vlaneseq
          %v1073 = vshrl.u32 %v1072, 7
          %v1074 = vsub.s32 1, %v1073
          %v1075 = vrot.slane %v1066, %v1074
          %v1076 = vlaneseq
          %v1077 = vshrl.u32 %v1076, 7
          %v1078 = vsub.s32 2, %v1077
          %v1079 = vrot.slane %v1066, %v1078
          %v1080 = vlaneseq
          %v1081 = vshrl.u32 %v1080, 7
          %v1082 = vsub.s32 3, %v1081
          %v1083 = vrot.slane %v1066, %v1082
          %v1088 = vadd.f32 %v1011, %v1071
          %v1089 = vadd.f32 %v1013, %v1075
          %v1090 = vadd.f32 %v1054, %v1079
          %v1091 = vadd.f32 %v1056, %v1083
          %v1092 = vadd.f32 %v1015, %v1071
          %v1093 = vadd.f32 %v1017, %v1075
          %v1094 = vadd.f32 %v1058, %v1079
          %v1095 = vadd.f32 %v1060, %v1083
          %1096 = vst [vmem:[#allocation13] sm:$0xff] %v1088
          %1097 = vst [vmem:[#allocation13 + $0x8] sm:$0xff] %v1089
          %1098 = vst [vmem:[#allocation13 + $0x10] sm:$0xff] %v1090
          %1099 = vst [vmem:[#allocation13 + $0x18] sm:$0xff] %v1091
          %1100 = vst [vmem:[#allocation13 + $0x20] sm:$0xff] %v1092
          %1101 = vst [vmem:[#allocation13 + $0x28] sm:$0xff] %v1093
          %1102 = vst [vmem:[#allocation13 + $0x30] sm:$0xff] %v1094
          %1103 = vst [vmem:[#allocation13 + $0x38] sm:$0xff] %v1095
        $region72: #{tpu_custom_call.1} parent=43 // pred_fallthru
          _
        %p1104 = scmp.gt.s32.totalorder %s26, 0
        // Predicated region
        $region73: #{tpu_custom_call.1} parent=43 // pred_check
          %p1105 = pneg %p1104
        $region74: #{tpu_custom_call.1} parent=43 // pred_check_branch
          %1107 = sbr.rel (%p1105) target = $region76
        $region75: #{tpu_custom_call.1} parent=43 // pred_region
          %v1108 = vld [vmem:[#allocation13] sm:$0xff]
          %v1109 = vld [vmem:[#allocation13 + $0x8] sm:$0xff]
          %v1110 = vld [vmem:[#allocation13 + $0x10] sm:$0xff]
          %v1111 = vld [vmem:[#allocation13 + $0x18] sm:$0xff]
          %v1112 = vld [vmem:[#allocation13 + $0x20] sm:$0xff]
          %v1113 = vld [vmem:[#allocation13 + $0x28] sm:$0xff]
          %v1114 = vld [vmem:[#allocation13 + $0x30] sm:$0xff]
          %v1115 = vld [vmem:[#allocation13 + $0x38] sm:$0xff]
          %v1116 = vadd.f32 %v1108, %v1011
          %v1117 = vadd.f32 %v1109, %v1013
          %v1118 = vadd.f32 %v1110, %v1054
          %v1119 = vadd.f32 %v1111, %v1056
          %v1120 = vadd.f32 %v1112, %v1015
          %v1121 = vadd.f32 %v1113, %v1017
          %v1122 = vadd.f32 %v1114, %v1058
          %v1123 = vadd.f32 %v1115, %v1060
          %1124 = vst [vmem:[#allocation13] sm:$0xff] %v1116
          %1125 = vst [vmem:[#allocation13 + $0x8] sm:$0xff] %v1117
          %1126 = vst [vmem:[#allocation13 + $0x10] sm:$0xff] %v1118
          %1127 = vst [vmem:[#allocation13 + $0x18] sm:$0xff] %v1119
          %1128 = vst [vmem:[#allocation13 + $0x20] sm:$0xff] %v1120
          %1129 = vst [vmem:[#allocation13 + $0x28] sm:$0xff] %v1121
          %1130 = vst [vmem:[#allocation13 + $0x30] sm:$0xff] %v1122
          %1131 = vst [vmem:[#allocation13 + $0x38] sm:$0xff] %v1123
        $region76: #{tpu_custom_call.1} parent=43 // pred_fallthru
          _
        // Predicated region
        $region77: #{tpu_custom_call.1} parent=43 // pred_check
          %p1132 = pneg %p185
        $region78: #{tpu_custom_call.1} parent=43 // pred_check_branch
          %1134 = sbr.rel (%p1132) target = $region80
        $region79: #{tpu_custom_call.1} parent=43 // pred_region
          %s1136 = ssub.s32 1024, 1024
          %1137 = vsyncadd [#allocation4], %s1136
          %s1138 = sshll.u32 [#allocation13], 4
          %s1139 = int_to_ptr.vmem [resolvable:$true] %s1138
          %1144 = dma.vmem_to_hbm [thread:$0]  %s1139, 1024, %s6, [#allocation4], 512, 512, 32
        $region80: #{tpu_custom_call.1} parent=43 // pred_fallthru
          _
        // Predicated region
        $region81: #{tpu_custom_call.1} parent=43 // pred_check
          %p1145 = pneg %p185
        $region82: #{tpu_custom_call.1} parent=43 // pred_check_branch
          %1147 = sbr.rel (%p1145) target = $region84
        $region83: #{tpu_custom_call.1} parent=43 // pred_region
          %1148 = dma.done [#allocation4], 1024
        $region84: #{tpu_custom_call.1} parent=43 // pred_fallthru
          _
      $region44: #{tpu_custom_call.1} parent=5 // pred_fallthru
        _
      %p1149 = scmp.le.s32.totalorder 2, %s21
      // Predicated region
      $region85: #{tpu_custom_call.1} parent=5 // pred_check
        %p1150 = pneg %p1149
      $region86: #{tpu_custom_call.1} parent=5 // pred_check_branch
        %1152 = sbr.rel (%p1150) target = $region88
      $region87: #{tpu_custom_call.1} parent=5 // pred_region
        %s1153 = ssub.s32 %s21, 2
      $region88: #{tpu_custom_call.1} parent=5 // pred_fallthru
        _
    $region6: #{tpu_custom_call.1} parent=1 // loop_footer
      %s25 = sadd.s32 1, %s21
    $region7: #{tpu_custom_call.1} parent=1 // loop_footer_branch
      %20 = sbr.rel target = $region3
    $region8: #{tpu_custom_call.1} parent=1 // loop_exit
      _
    %1154 = vsyncpa [#allocation3], 1
    %s1155 = scalar_lea.sflag [#allocation3], 1
    %1156 = vsyncpa %s1155, 1
    %1157 = vsyncpa [#allocation6], 1
    %s1158 = scalar_lea.sflag [#allocation6], 1
    %1159 = vsyncpa %s1158, 1
    %1160 = vsyncpa [#allocation9], 1
    %s1161 = scalar_lea.sflag [#allocation9], 1
    %1162 = vsyncpa %s1161, 1
    %1163 = vsyncpa [#allocation12], 1
    %1164 = vsyncpa [#allocation4], 1
    %s1165 = scalar_lea.sflag [#allocation4], 1
    %1166 = vsyncpa %s1165, 1

</llo_original>
